<compile_context>
chip_gen: v5e
topology: v5e:2x2
jax: 0.10.0
libtpu: 0.0.40
codegen_flags: <defaults>
</compile_context>

<pallas_src>
import functools

import numpy as np
import jax
import jax.numpy as jnp
from jax.experimental import pallas as pl
from jax.experimental.pallas import tpu as pltpu


def _flip_cols(a, n):
    """Reverse the (tiny, static width n) last axis via static column slices."""
    if n <= 1:
        return a
    return jnp.concatenate([a[..., i:i + 1] for i in range(n - 1, -1, -1)], axis=-1)


def _pad_fir_kernel(w_ref, x_ref, o_ref, *, ksize, mode, val, tile_rows, fix_right):
    """Depthwise FIR of x under odd/even/const extension + crop, one row tile.

    w_ref: (Rp, K)      resident per-row FIR taps (f32), sliced by program_id
    x_ref: (TILE_R, Lp) rows = batch*channels, lanes = time (Lp % 128 == 0)
    o_ref: (TILE_R, Lp)
    """
    x = x_ref[...]
    if x.dtype != jnp.float32:
        x = x.astype(jnp.float32)           # bf16-in supported; accumulate in f32
    L = x.shape[-1]                          # == Lp (lane-dense)
    K = ksize
    half = K // 2
    lane_axis = x.ndim - 1                   # pltpu.roll requires a non-negative axis

    # Slice this tile's taps out of the single resident weight block (no per-step DMA).
    row0 = pl.multiple_of(pl.program_id(0) * tile_rows, 8)
    w = w_ref[pl.ds(row0, tile_rows), :]
    if w.dtype != jnp.float32:
        w = w.astype(jnp.float32)
    taps = [w[:, k:k + 1] for k in range(K)]

    # Interior lanes: circular lane rotations (XLU) + VPU FMAs. Wrapped lanes
    # ([0, half) and [L-half, L)) are repaired by narrow sub-stores below.
    acc = taps[half] * x
    for k in range(K):
        if k == half:
            continue
        acc = acc + taps[k] * pltpu.roll(x, shift=(half - k) % L, axis=lane_axis)
    o_ref[...] = acc if acc.dtype == o_ref.dtype else acc.astype(o_ref.dtype)

    if half > 0:
        # Left boundary: `half`-wide edge extension immediately before lane 0.
        if mode == "odd":
            lpad = 2.0 * x[..., :1] - _flip_cols(x[..., 1:half + 1], half)
        elif mode == "even":
            lpad = _flip_cols(x[..., 1:half + 1], half)
        else:  # const
            lpad = jnp.full_like(x[..., :half], val)
        e_left = jnp.concatenate([lpad, x[..., :2 * half]], axis=-1)
        lb = taps[0] * e_left[..., :half]
        for k in range(1, K):
            lb = lb + taps[k] * e_left[..., k:k + half]
        o_ref[:, :half] = lb.astype(o_ref.dtype)      # narrow masked store, not a full-tile where

        if fix_right:
            # Only needed when the time axis was NOT right-padded in the wrapper.
            if mode == "odd":
                rpad = 2.0 * x[..., L - 1:L] - _flip_cols(x[..., L - 1 - half:L - 1], half)
            elif mode == "even":
                rpad = _flip_cols(x[..., L - 1 - half:L - 1], half)
            else:
                rpad = jnp.full_like(x[..., :half], val)
            e_right = jnp.concatenate([x[..., L - 2 * half:], rpad], axis=-1)
            rb = taps[0] * e_right[..., :half]
            for k in range(1, K):
                rb = rb + taps[k] * e_right[..., k:k + half]
            o_ref[:, L - half:] = rb.astype(o_ref.dtype)


def _vmem_plan():
    """(per-x-block budget bytes, vmem_limit_bytes) gated on chip VMEM capacity."""
    try:
        info = pltpu.get_tpu_info()
        cap = int(getattr(info, "vmem_capacity_bytes", 64 << 20))
    except Exception:
        cap = 64 << 20                       # conservative (v7x-like) default
    if cap >= (96 << 20):                    # v5e / v6e: 128 MiB physical VMEM
        return 6 << 20, 64 << 20
    return 2 << 20, 32 << 20                 # v7x: 64 MiB physical / 32 MiB scoped


def _pick_tile_rows(R, Lp, budget_bytes):
    """Row tile (multiple of 8) fitting the per-block budget, with >=2 grid steps when R>=16."""
    rp8 = -(-R // 8) * 8
    by_budget = max(8, (budget_bytes // (4 * Lp)) // 8 * 8)
    cap = rp8 if rp8 < 16 else max(8, (rp8 // 2) // 8 * 8)   # keep both TCs busy on v7x
    return int(min(by_budget, cap, rp8))


def pad_filter(x, weight, padlen, mode="odd", val=0.0, tile_rows=None):
    """x: (B, C, L); weight: (C, K) depthwise FIR taps. Returns (B, C, L)."""
    B, C, L = x.shape
    Cw, K = weight.shape
    half = K // 2
    assert Cw == C
    assert K % 2 == 1, "odd FIR length required"
    assert padlen >= half, "padlen must cover the filter half-width"
    assert padlen + 1 <= L, "odd/even extension needs padlen < L"
    assert L >= 2 * half

    R = B * C
    xr = x.reshape(R, L)                                   # free: merge leading dims

    # --- Lane-dense time axis: pad L up to a multiple of 128 (crop after). ---
    LANE = 128
    Lp = -(-L // LANE) * LANE
    if Lp != L and Lp - L < half:
        Lp += LANE                                         # ensure >= half pad lanes
    if Lp != L:
        pieces = [xr]
        if half > 0:                                       # exact right-edge extension samples
            if mode == "odd":
                rext = 2.0 * xr[:, L - 1:L] - jnp.flip(xr[:, L - 1 - half:L - 1], axis=-1)
            elif mode == "even":
                rext = jnp.flip(xr[:, L - 1 - half:L - 1], axis=-1)
            else:
                rext = jnp.full((R, half), val, xr.dtype)
            pieces.append(rext.astype(xr.dtype))
        tail = Lp - L - (half if half > 0 else 0)
        if tail > 0:
            pieces.append(jnp.zeros((R, tail), xr.dtype))
        xr = jnp.concatenate(pieces, axis=-1)
        fix_right = False                                  # right edge handled by the pad lanes
    else:
        fix_right = True

    # --- Row tiling: budget/VMEM gated; pad rows so every block stays bounded. ---
    block_budget, vmem_limit = _vmem_plan()
    if tile_rows is None:
        tile_rows = _pick_tile_rows(R, Lp, block_budget)
    else:
        assert tile_rows % 8 == 0 and tile_rows > 0
    Rp = -(-R // tile_rows) * tile_rows
    if Rp != R:
        xr = jnp.concatenate([xr, jnp.zeros((Rp - R, Lp), xr.dtype)], axis=0)

    wr = jnp.tile(weight.astype(jnp.float32), (B, 1))      # (R, K) per-row taps (tiny)
    if Rp != R:
        wr = jnp.concatenate([wr, jnp.zeros((Rp - R, K), jnp.float32)], axis=0)

    grid = (Rp // tile_rows,)
    kern = functools.partial(_pad_fir_kernel, ksize=int(K), mode=mode, val=float(val),
                             tile_rows=int(tile_rows), fix_right=bool(fix_right))
    itemsize = int(np.dtype(x.dtype).itemsize)
    out = pl.pallas_call(
        kern,
        out_shape=jax.ShapeDtypeStruct((Rp, Lp), x.dtype),
        grid=grid,
        in_specs=[pl.BlockSpec((Rp, K), lambda i: (0, 0)),           # resident taps, no per-step DMA
                  pl.BlockSpec((tile_rows, Lp), lambda i: (i, 0))],
        out_specs=pl.BlockSpec((tile_rows, Lp), lambda i: (i, 0)),
        compiler_params=pltpu.CompilerParams(
            dimension_semantics=("parallel",),
            vmem_limit_bytes=vmem_limit),
        cost_estimate=pl.CostEstimate(
            flops=(2 * K - 1) * Rp * Lp,
            transcendentals=0,
            bytes_accessed=2 * Rp * Lp * itemsize + Rp * K * 4),
    )(wr, xr)
    return out[:R, :L].reshape(B, C, L)


def _reference(x, weight, padlen, mode="odd", val=0.0):
    """Pure-JAX reference matching the PyTorch module (explicit f32 correlation)."""
    n = padlen
    if mode == "odd":
        le, re = x[..., :1], x[..., -1:]
        lext = jnp.flip(x[..., 1:n + 1], axis=-1)
        rext = jnp.flip(x[..., -(n + 1):-1], axis=-1)
        ext = jnp.concatenate([2 * le - lext, x, 2 * re - rext], axis=-1)
    elif mode == "even":
        lext = jnp.flip(x[..., 1:n + 1], axis=-1)
        rext = jnp.flip(x[..., -(n + 1):-1], axis=-1)
        ext = jnp.concatenate([lext, x, rext], axis=-1)
    else:
        pad = jnp.full(x.shape[:-1] + (n,), val, x.dtype)
        ext = jnp.concatenate([pad, x, pad], axis=-1)
    # Depthwise conv1d (padding='same', cross-correlation) followed by crop [n:-n].
    B, C, L = x.shape
    K = weight.shape[-1]
    half = K // 2
    start = n - half
    extf = ext.astype(jnp.float32)
    y = jnp.zeros((B, C, L), jnp.float32)
    for k in range(K):
        y = y + weight[None, :, k:k + 1].astype(jnp.float32) * extf[..., start + k:start + k + L]
    return y.astype(x.dtype)


if __name__ == "__main__":
    key = jax.random.PRNGKey(0)
    kx1, kw1, kx2, kw2, kx3, kw3, kx4, kw4 = jax.random.split(key, 8)

    # 1) odd extension (default), lane-dense L.
    B, C, L, padlen, K = 2, 4, 128, 8, 5
    x = jax.random.normal(kx1, (B, C, L), dtype=jnp.float32)
    w = 0.2 * jax.random.normal(kw1, (C, K), dtype=jnp.float32)
    out = jax.block_until_ready(pad_filter(x, w, padlen, mode="odd"))
    np.testing.assert_allclose(np.asarray(out), np.asarray(_reference(x, w, padlen, "odd")),
                               rtol=1e-5, atol=1e-5)

    # 2) even extension, multi-block row grid (exercises the pipelined / 2-step path).
    B, C, L, padlen, K = 4, 4, 128, 6, 5
    x = jax.random.normal(kx2, (B, C, L), dtype=jnp.float32)
    w = 0.2 * jax.random.normal(kw2, (C, K), dtype=jnp.float32)
    out = jax.block_until_ready(pad_filter(x, w, padlen, mode="even", tile_rows=8))
    np.testing.assert_allclose(np.asarray(out), np.asarray(_reference(x, w, padlen, "even")),
                               rtol=1e-5, atol=1e-5)

    # 3) constant padding, K=3 path.
    B, C, L, padlen, K = 2, 4, 128, 4, 3
    x = jax.random.normal(kx3, (B, C, L), dtype=jnp.float32)
    w = 0.2 * jax.random.normal(kw3, (C, K), dtype=jnp.float32)
    out = jax.block_until_ready(pad_filter(x, w, padlen, mode="const", val=0.5))
    np.testing.assert_allclose(np.asarray(out),
                               np.asarray(_reference(x, w, padlen, "const", val=0.5)),
                               rtol=1e-5, atol=1e-5)

    # 4) non-multiple-of-128 L: exercises the lane-dense right-pad path.
    B, C, L, padlen, K = 2, 4, 96, 6, 5
    x = jax.random.normal(kx4, (B, C, L), dtype=jnp.float32)
    w = 0.2 * jax.random.normal(kw4, (C, K), dtype=jnp.float32)
    out = jax.block_until_ready(pad_filter(x, w, padlen, mode="odd"))
    np.testing.assert_allclose(np.asarray(out), np.asarray(_reference(x, w, padlen, "odd")),
                               rtol=1e-5, atol=1e-5)

    print("KERNEL_OK")
</pallas_src>

<mosaic_0001>
module attributes {stable_mosaic.version = 11 : i64} {
  func.func @_pad_fir_kernel(%arg0: i32, %arg1: memref<8x5xf32, #tpu.memory_space<vmem>>, %arg2: memref<8x128xf32, #tpu.memory_space<vmem>>, %arg3: memref<8x128xf32, #tpu.memory_space<vmem>>) attributes {dimension_semantics = [#tpu.dimension_semantics<parallel>], iteration_bounds = array<i64: 1>, scalar_prefetch = 0 : i64, scratch_operands = 0 : i64, tpu.core_type = #tpu.core_type<tc>, window_params = [{pipeline_mode = #tpu.pipeline_mode<synchronous>, transform_indices = @transform_0, window_bounds = array<i64: 8, 5>}, {transform_indices = @transform_1, window_bounds = array<i64: 8, 128>}, {transform_indices = @transform_2, window_bounds = array<i64: 8, 128>}]} {
    %c0 = arith.constant 0 : index
    %c0_0 = arith.constant 0 : index
    %0 = vector.load %arg2[%c0, %c0_0] : memref<8x128xf32, #tpu.memory_space<vmem>>, vector<8x128xf32>
    %c8_i32 = arith.constant 8 : i32
    %1 = arith.muli %arg0, %c8_i32 : i32
    %2 = tpu.assume_multiple %1, 8 : i32
    %3 = arith.index_cast %2 : i32 to index
    %c0_1 = arith.constant 0 : index
    %4 = vector.load %arg1[%3, %c0_1] : memref<8x5xf32, #tpu.memory_space<vmem>>, vector<8x5xf32>
    %5 = vector.extract_strided_slice %4 {offsets = [0, 0], sizes = [8, 1], strides = [1, 1]} : vector<8x5xf32> to vector<8x1xf32>
    %6 = vector.extract_strided_slice %4 {offsets = [0, 1], sizes = [8, 1], strides = [1, 1]} : vector<8x5xf32> to vector<8x1xf32>
    %7 = vector.extract_strided_slice %4 {offsets = [0, 2], sizes = [8, 1], strides = [1, 1]} : vector<8x5xf32> to vector<8x1xf32>
    %8 = vector.extract_strided_slice %4 {offsets = [0, 3], sizes = [8, 1], strides = [1, 1]} : vector<8x5xf32> to vector<8x1xf32>
    %9 = vector.extract_strided_slice %4 {offsets = [0, 4], sizes = [8, 1], strides = [1, 1]} : vector<8x5xf32> to vector<8x1xf32>
    %10 = vector.broadcast %7 : vector<8x1xf32> to vector<8x128xf32>
    %11 = arith.mulf %10, %0 : vector<8x128xf32>
    %c2_i32 = arith.constant 2 : i32
    %12 = tpu.dynamic_rotate %0 by %c2_i32 dim 1 : vector<8x128xf32>, i32 -> vector<8x128xf32>
    %13 = vector.broadcast %5 : vector<8x1xf32> to vector<8x128xf32>
    %14 = arith.mulf %13, %12 : vector<8x128xf32>
    %15 = arith.addf %11, %14 : vector<8x128xf32>
    %c1_i32 = arith.constant 1 : i32
    %16 = tpu.dynamic_rotate %0 by %c1_i32 dim 1 : vector<8x128xf32>, i32 -> vector<8x128xf32>
    %17 = vector.broadcast %6 : vector<8x1xf32> to vector<8x128xf32>
    %18 = arith.mulf %17, %16 : vector<8x128xf32>
    %19 = arith.addf %15, %18 : vector<8x128xf32>
    %c127_i32 = arith.constant 127 : i32
    %20 = tpu.dynamic_rotate %0 by %c127_i32 dim 1 : vector<8x128xf32>, i32 -> vector<8x128xf32>
    %21 = vector.broadcast %8 : vector<8x1xf32> to vector<8x128xf32>
    %22 = arith.mulf %21, %20 : vector<8x128xf32>
    %23 = arith.addf %19, %22 : vector<8x128xf32>
    %c126_i32 = arith.constant 126 : i32
    %24 = tpu.dynamic_rotate %0 by %c126_i32 dim 1 : vector<8x128xf32>, i32 -> vector<8x128xf32>
    %25 = vector.broadcast %9 : vector<8x1xf32> to vector<8x128xf32>
    %26 = arith.mulf %25, %24 : vector<8x128xf32>
    %27 = arith.addf %23, %26 : vector<8x128xf32>
    %c0_2 = arith.constant 0 : index
    %c0_3 = arith.constant 0 : index
    %28 = vector.load %arg3[%c0_2, %c0_3] : memref<8x128xf32, #tpu.memory_space<vmem>>, vector<8x128xf32>
    tpu.vector_store %arg3[%c0_2, %c0_3], %27 {strides = array<i32>} : memref<8x128xf32, #tpu.memory_space<vmem>>, vector<8x128xf32>,
    %29 = vector.extract_strided_slice %0 {offsets = [0, 0], sizes = [8, 1], strides = [1, 1]} : vector<8x128xf32> to vector<8x1xf32>
    %cst = arith.constant 2.000000e+00 : f32
    %30 = vector.broadcast %cst : f32 to vector<8x1xf32>
    %31 = arith.mulf %30, %29 : vector<8x1xf32>
    %32 = vector.extract_strided_slice %0 {offsets = [0, 1], sizes = [8, 2], strides = [1, 1]} : vector<8x128xf32> to vector<8x2xf32>
    %33 = vector.extract_strided_slice %32 {offsets = [0, 1], sizes = [8, 1], strides = [1, 1]} : vector<8x2xf32> to vector<8x1xf32>
    %34 = vector.extract_strided_slice %32 {offsets = [0, 0], sizes = [8, 1], strides = [1, 1]} : vector<8x2xf32> to vector<8x1xf32>
    %35 = tpu.concatenate %33, %34 in 1 : vector<8x1xf32>, vector<8x1xf32> -> vector<8x2xf32>
    %36 = vector.broadcast %31 : vector<8x1xf32> to vector<8x2xf32>
    %37 = arith.subf %36, %35 : vector<8x2xf32>
    %38 = vector.extract_strided_slice %0 {offsets = [0, 0], sizes = [8, 4], strides = [1, 1]} : vector<8x128xf32> to vector<8x4xf32>
    %39 = tpu.concatenate %37, %38 in 1 : vector<8x2xf32>, vector<8x4xf32> -> vector<8x6xf32>
    %40 = vector.extract_strided_slice %39 {offsets = [0, 0], sizes = [8, 2], strides = [1, 1]} : vector<8x6xf32> to vector<8x2xf32>
    %41 = vector.broadcast %5 : vector<8x1xf32> to vector<8x2xf32>
    %42 = arith.mulf %41, %40 : vector<8x2xf32>
    %43 = vector.extract_strided_slice %39 {offsets = [0, 1], sizes = [8, 2], strides = [1, 1]} : vector<8x6xf32> to vector<8x2xf32>
    %44 = vector.broadcast %6 : vector<8x1xf32> to vector<8x2xf32>
    %45 = arith.mulf %44, %43 : vector<8x2xf32>
    %46 = arith.addf %42, %45 : vector<8x2xf32>
    %47 = vector.extract_strided_slice %39 {offsets = [0, 2], sizes = [8, 2], strides = [1, 1]} : vector<8x6xf32> to vector<8x2xf32>
    %48 = vector.broadcast %7 : vector<8x1xf32> to vector<8x2xf32>
    %49 = arith.mulf %48, %47 : vector<8x2xf32>
    %50 = arith.addf %46, %49 : vector<8x2xf32>
    %51 = vector.extract_strided_slice %39 {offsets = [0, 3], sizes = [8, 2], strides = [1, 1]} : vector<8x6xf32> to vector<8x2xf32>
    %52 = vector.broadcast %8 : vector<8x1xf32> to vector<8x2xf32>
    %53 = arith.mulf %52, %51 : vector<8x2xf32>
    %54 = arith.addf %50, %53 : vector<8x2xf32>
    %55 = vector.extract_strided_slice %39 {offsets = [0, 4], sizes = [8, 2], strides = [1, 1]} : vector<8x6xf32> to vector<8x2xf32>
    %56 = vector.broadcast %9 : vector<8x1xf32> to vector<8x2xf32>
    %57 = arith.mulf %56, %55 : vector<8x2xf32>
    %58 = arith.addf %54, %57 : vector<8x2xf32>
    %c0_4 = arith.constant 0 : index
    %c0_5 = arith.constant 0 : index
    %59 = vector.load %arg3[%c0_4, %c0_5] : memref<8x128xf32, #tpu.memory_space<vmem>>, vector<8x2xf32>
    tpu.vector_store %arg3[%c0_4, %c0_5], %58 {strides = array<i32>} : memref<8x128xf32, #tpu.memory_space<vmem>>, vector<8x2xf32>,
    %60 = vector.extract_strided_slice %0 {offsets = [0, 127], sizes = [8, 1], strides = [1, 1]} : vector<8x128xf32> to vector<8x1xf32>
    %cst_6 = arith.constant 2.000000e+00 : f32
    %61 = vector.broadcast %cst_6 : f32 to vector<8x1xf32>
    %62 = arith.mulf %61, %60 : vector<8x1xf32>
    %63 = vector.extract_strided_slice %0 {offsets = [0, 125], sizes = [8, 2], strides = [1, 1]} : vector<8x128xf32> to vector<8x2xf32>
    %64 = vector.extract_strided_slice %63 {offsets = [0, 1], sizes = [8, 1], strides = [1, 1]} : vector<8x2xf32> to vector<8x1xf32>
    %65 = vector.extract_strided_slice %63 {offsets = [0, 0], sizes = [8, 1], strides = [1, 1]} : vector<8x2xf32> to vector<8x1xf32>
    %66 = tpu.concatenate %64, %65 in 1 : vector<8x1xf32>, vector<8x1xf32> -> vector<8x2xf32>
    %67 = vector.broadcast %62 : vector<8x1xf32> to vector<8x2xf32>
    %68 = arith.subf %67, %66 : vector<8x2xf32>
    %69 = vector.extract_strided_slice %0 {offsets = [0, 124], sizes = [8, 4], strides = [1, 1]} : vector<8x128xf32> to vector<8x4xf32>
    %70 = tpu.concatenate %69, %68 in 1 : vector<8x4xf32>, vector<8x2xf32> -> vector<8x6xf32>
    %71 = vector.extract_strided_slice %70 {offsets = [0, 0], sizes = [8, 2], strides = [1, 1]} : vector<8x6xf32> to vector<8x2xf32>
    %72 = vector.broadcast %5 : vector<8x1xf32> to vector<8x2xf32>
    %73 = arith.mulf %72, %71 : vector<8x2xf32>
    %74 = vector.extract_strided_slice %70 {offsets = [0, 1], sizes = [8, 2], strides = [1, 1]} : vector<8x6xf32> to vector<8x2xf32>
    %75 = vector.broadcast %6 : vector<8x1xf32> to vector<8x2xf32>
    %76 = arith.mulf %75, %74 : vector<8x2xf32>
    %77 = arith.addf %73, %76 : vector<8x2xf32>
    %78 = vector.extract_strided_slice %70 {offsets = [0, 2], sizes = [8, 2], strides = [1, 1]} : vector<8x6xf32> to vector<8x2xf32>
    %79 = vector.broadcast %7 : vector<8x1xf32> to vector<8x2xf32>
    %80 = arith.mulf %79, %78 : vector<8x2xf32>
    %81 = arith.addf %77, %80 : vector<8x2xf32>
    %82 = vector.extract_strided_slice %70 {offsets = [0, 3], sizes = [8, 2], strides = [1, 1]} : vector<8x6xf32> to vector<8x2xf32>
    %83 = vector.broadcast %8 : vector<8x1xf32> to vector<8x2xf32>
    %84 = arith.mulf %83, %82 : vector<8x2xf32>
    %85 = arith.addf %81, %84 : vector<8x2xf32>
    %86 = vector.extract_strided_slice %70 {offsets = [0, 4], sizes = [8, 2], strides = [1, 1]} : vector<8x6xf32> to vector<8x2xf32>
    %87 = vector.broadcast %9 : vector<8x1xf32> to vector<8x2xf32>
    %88 = arith.mulf %87, %86 : vector<8x2xf32>
    %89 = arith.addf %85, %88 : vector<8x2xf32>
    %c0_7 = arith.constant 0 : index
    %c126 = arith.constant 126 : index
    %90 = vector.load %arg3[%c0_7, %c126] : memref<8x128xf32, #tpu.memory_space<vmem>>, vector<8x2xf32>
    tpu.vector_store %arg3[%c0_7, %c126], %89 {strides = array<i32>} : memref<8x128xf32, #tpu.memory_space<vmem>>, vector<8x2xf32>,
    return
  }
  func.func @transform_0(%arg0: i32) -> (i32, i32) {
    %c0_i32 = arith.constant 0 : i32
    %c0_i32_0 = arith.constant 0 : i32
    %c0_i32_1 = arith.constant 0 : i32
    return %c0_i32, %c0_i32_0 : i32, i32
  }
  func.func @transform_1(%arg0: i32) -> (i32, i32) {
    %c0_i32 = arith.constant 0 : i32
    %c0_i32_0 = arith.constant 0 : i32
    return %arg0, %c0_i32 : i32, i32
  }
  func.func @transform_2(%arg0: i32) -> (i32, i32) {
    %c0_i32 = arith.constant 0 : i32
    %c0_i32_0 = arith.constant 0 : i32
    return %arg0, %c0_i32 : i32, i32
  }
}

</mosaic_0001>

<llo_original>
// kernel: tpu_custom_call.1
$region0: #{tpu_custom_call.1}
  #allocation0 [shape = 'u32[]', space=smem, size = 0x4, offset = 0x4, fixed_abs, tag = 'smem constant byte address 0x4 - core index']
  #allocation1 [shape = 'u32[72,128]{1,0:T(1,128)}', space=vmem, size = 0x9000, scoped, tag = 'internal scratch']
  %s0 = inlined_call_operand.hbm [shape: f32[8,5], index: 0, kind: input, shape index: {}]
  %s1 = inlined_call_operand.hbm [shape: f32[8,128], index: 1, kind: input, shape index: {}]
  %s2 = inlined_call_operand.hbm [shape: f32[8,128], index: 2, kind: output, shape index: {}]
  %s3 = sld [smem:[#allocation0]]
  $region26: #{tpu_custom_call.1} parent=0
    _
  %s5 = ssub.s32 1, %s3
  %s6 = scalar_select 0, %s5, %s3
  $region1: #{tpu_custom_call.1} parent=0
    #allocation2 [shape = 'u8[4096]{0}', space=vmem, size = 0x1000, scoped, tag = 'input window, operand 0, single buffered']
    #allocation3 [shape = 's32[1]{0}', space=sflag, size = 0x4, scoped, tag = 'scoped memory for tpu_custom_call.1']
    #allocation4 [shape = 's32[1]{0}', space=sflag, size = 0x4, scoped, tag = 'scoped memory for tpu_custom_call.1']
    #allocation5 [shape = 'u8[4096]{0}', space=vmem, size = 0x1000, scoped, tag = 'input window, operand 1, single buffered']
    #allocation6 [shape = 's32[1]{0}', space=sflag, size = 0x4, scoped, tag = 'scoped memory for tpu_custom_call.1']
    #allocation7 [shape = 'u8[4096]{0}', space=vmem, size = 0x1000, scoped, tag = 'output window, operand 0, single buffered']
    %7 = vsyncpa [#allocation3], 0
    %8 = vsyncpa [#allocation6], 0
    %9 = vsyncpa [#allocation4], 0
    // Predicated region
    $region2: #{tpu_custom_call.1} parent=1 // pred_check
      _
    $region3: #{tpu_custom_call.1} parent=1 // pred_check_branch
      %11 = sbr.rel (0) target = $region5
    $region4: #{tpu_custom_call.1} parent=1 // pred_region
      %13 = vsyncadd [#allocation3], 0
      %s15 = sshll.u32 %s0, 4
      %s16 = int_to_ptr.hbm [resolvable:$true] %s15
      %s17 = sshll.u32 [#allocation2], 4
      %s18 = int_to_ptr.vmem [resolvable:$true] %s17
      %20 = dma.hbm_to_vmem [thread:$0]  %s16, 128, %s18, [#allocation3]
    $region5: #{tpu_custom_call.1} parent=1 // pred_fallthru
      _
    // Predicated region
    $region6: #{tpu_custom_call.1} parent=1 // pred_check
      _
    $region7: #{tpu_custom_call.1} parent=1 // pred_check_branch
      %22 = sbr.rel (0) target = $region9
    $region8: #{tpu_custom_call.1} parent=1 // pred_region
      %24 = vsyncadd [#allocation6], 0
      %s26 = sshll.u32 %s1, 4
      %s27 = int_to_ptr.hbm [resolvable:$true] %s26
      %s28 = sshll.u32 [#allocation5], 4
      %s29 = int_to_ptr.vmem [resolvable:$true] %s28
      %31 = dma.hbm_to_vmem [thread:$0]  %s27, 128, %s29, [#allocation6]
    $region9: #{tpu_custom_call.1} parent=1 // pred_fallthru
      _
    // Predicated region
    $region10: #{tpu_custom_call.1} parent=1 // pred_check
      _
    $region11: #{tpu_custom_call.1} parent=1 // pred_check_branch
      %33 = sbr.rel (0) target = $region13
    $region12: #{tpu_custom_call.1} parent=1 // pred_region
      %35 = dma.done [#allocation3], 128
    $region13: #{tpu_custom_call.1} parent=1 // pred_fallthru
      _
    // Predicated region
    $region14: #{tpu_custom_call.1} parent=1 // pred_check
      _
    $region15: #{tpu_custom_call.1} parent=1 // pred_check_branch
      %37 = sbr.rel (0) target = $region17
    $region16: #{tpu_custom_call.1} parent=1 // pred_region
      %39 = dma.done [#allocation6], 128
    $region17: #{tpu_custom_call.1} parent=1 // pred_fallthru
      _
    %v40 = vld [vmem:[#allocation5] sm:$0xff]
    %s41 = smul.u32 0, 8
    %s42 = scalar_lea.vmem [#allocation2], %s41
    %v43 = vld [vmem:[%s42] sm:$0xff]
    %45 = vset.pattern.permute.xlu0 2
    %46 = vperm.xlu0 %45, %v43
    %v47 = vpop.permute.xlu0 %46
    %v49 = vmul.f32 %v47, %v40
    %50 = vrot.lane.b32.xlu0 %v40, 2
    %v51 = vpop.permute.xlu0 %50
    %52 = vset.pattern.permute.xlu0 0
    %53 = vperm.xlu0 %52, %v43
    %v54 = vpop.permute.xlu0 %53
    %v56 = vmul.f32 %v54, %v51
    %v57 = vadd.f32 %v49, %v56
    %58 = vrot.lane.b32.xlu0 %v40, 1
    %v59 = vpop.permute.xlu0 %58
    %60 = vset.pattern.permute.xlu0 1
    %61 = vperm.xlu0 %60, %v43
    %v62 = vpop.permute.xlu0 %61
    %v64 = vmul.f32 %v62, %v59
    %v65 = vadd.f32 %v57, %v64
    %66 = vrot.lane.b32.xlu0 %v40, 127
    %v67 = vpop.permute.xlu0 %66
    %68 = vset.pattern.permute.xlu0 3
    %69 = vperm.xlu0 %68, %v43
    %v70 = vpop.permute.xlu0 %69
    %v72 = vmul.f32 %v70, %v67
    %v73 = vadd.f32 %v65, %v72
    %74 = vrot.lane.b32.xlu0 %v40, 126
    %v75 = vpop.permute.xlu0 %74
    %76 = vset.pattern.permute.xlu0 4
    %77 = vperm.xlu0 %76, %v43
    %v78 = vpop.permute.xlu0 %77
    %v80 = vmul.f32 %v78, %v75
    %v81 = vadd.f32 %v73, %v80
    %82 = vst [vmem:[#allocation7] sm:$0xff] %v81
    %v83 = vmul.f32 %v40, 2.0
    %85 = vrot.lane.b32.xlu0 %v40, 126
    %v86 = vpop.permute.xlu0 %85
    %vm88 = vcmask 7168
    %v89 = vsel %vm88, %v86, %v40
    %91 = vset.pattern.permute.xlu0 0
    %92 = vperm.xlu0 %91, %v83
    %v93 = vpop.permute.xlu0 %92
    %v95 = vsub.f32 %v93, %v89
    %96 = vrot.lane.b32.xlu0 %v40, 2
    %v97 = vpop.permute.xlu0 %96
    %vm99 = vcmask 15360
    %v100 = vsel %vm99, %v95, %v97
    %v101 = vmul.f32 %v54, %v100
    %v102 = vmul.f32 %v62, %v100
    %104 = vrot.lane.b32.xlu0 %v102, 127
    %v105 = vpop.permute.xlu0 %104
    %v107 = vadd.f32 %v101, %v105
    %v108 = vmul.f32 %v47, %v100
    %110 = vrot.lane.b32.xlu0 %v108, 126
    %v111 = vpop.permute.xlu0 %110
    %v113 = vadd.f32 %v107, %v111
    %v114 = vmul.f32 %v70, %v100
    %116 = vrot.lane.b32.xlu0 %v114, 125
    %v117 = vpop.permute.xlu0 %116
    %v119 = vadd.f32 %v113, %v117
    %v120 = vmul.f32 %v78, %v100
    %122 = vrot.lane.b32.xlu0 %v120, 124
    %v123 = vpop.permute.xlu0 %122
    %v125 = vadd.f32 %v119, %v123
    %126 = vst.msk [vmem:[#allocation7] sm:$0xff] %vm99, %v125
    %127 = vrot.lane.b32.xlu0 %v40, 4
    %v128 = vpop.permute.xlu0 %127
    %v130 = vsel %vm88, %v97, %v128
    %131 = vset.pattern.permute.xlu0 127
    %132 = vperm.xlu0 %131, %v83
    %v133 = vpop.permute.xlu0 %132
    %v135 = vsub.f32 %v133, %v130
    %137 = vrot.lane.b32.xlu0 %v135, 4
    %v138 = vpop.permute.xlu0 %137
    %vm140 = vcmask 31744
    %v141 = vsel %vm140, %v128, %v138
    %v142 = vmul.f32 %v54, %v141
    %v143 = vmul.f32 %v62, %v141
    %145 = vrot.lane.b32.xlu0 %v143, 127
    %v146 = vpop.permute.xlu0 %145
    %v148 = vadd.f32 %v142, %v146
    %v149 = vmul.f32 %v47, %v141
    %151 = vrot.lane.b32.xlu0 %v149, 126
    %v152 = vpop.permute.xlu0 %151
    %v154 = vadd.f32 %v148, %v152
    %v155 = vmul.f32 %v70, %v141
    %157 = vrot.lane.b32.xlu0 %v155, 125
    %v158 = vpop.permute.xlu0 %157
    %v160 = vadd.f32 %v154, %v158
    %v161 = vmul.f32 %v78, %v141
    %163 = vrot.lane.b32.xlu0 %v161, 124
    %v164 = vpop.permute.xlu0 %163
    %v166 = vadd.f32 %v160, %v164
    %168 = vrot.lane.b32.xlu0 %v166, 126
    %v169 = vpop.permute.xlu0 %168
    %vm171 = vcmask 1048560
    %172 = vst.msk [vmem:[#allocation7] sm:$0xff] %vm171, %v169
    // Predicated region
    $region18: #{tpu_custom_call.1} parent=1 // pred_check
      _
    $region19: #{tpu_custom_call.1} parent=1 // pred_check_branch
      %174 = sbr.rel (0) target = $region21
    $region20: #{tpu_custom_call.1} parent=1 // pred_region
      %176 = vsyncadd [#allocation4], 0
      %s178 = sshll.u32 [#allocation7], 4
      %s179 = int_to_ptr.vmem [resolvable:$true] %s178
      %s180 = sshll.u32 %s2, 4
      %s181 = int_to_ptr.hbm [resolvable:$true] %s180
      %183 = dma.vmem_to_hbm [thread:$0]  %s179, 128, %s181, [#allocation4]
    $region21: #{tpu_custom_call.1} parent=1 // pred_fallthru
      _
    // Predicated region
    $region22: #{tpu_custom_call.1} parent=1 // pred_check
      _
    $region23: #{tpu_custom_call.1} parent=1 // pred_check_branch
      %185 = sbr.rel (0) target = $region25
    $region24: #{tpu_custom_call.1} parent=1 // pred_region
      %187 = dma.done [#allocation4], 128
    $region25: #{tpu_custom_call.1} parent=1 // pred_fallthru
      _
    %188 = vsyncpa [#allocation3], 1
    %189 = vsyncpa [#allocation6], 1
    %190 = vsyncpa [#allocation4], 1

</llo_original>
